<compile_context>
chip_gen: v7x
topology: tpu7x:2x2x1
jax: 0.10.0
libtpu: 0.0.40
codegen_flags: <defaults>
</compile_context>

<pallas_src>
from functools import partial

import jax
import jax.numpy as jnp
from jax.experimental import pallas as pl
from jax.experimental.pallas import tpu as pltpu


def _controller_kernel(hidden_dim, factor_num, l, inv_divide,
                       proto_ref, all_ref,
                       wp_ref, bp_ref,
                       wa_ref, ba_ref,
                       wfc_ref, bfc_ref,
                       wpr_ref, bpr_ref,
                       out_ref):
    f32 = jnp.float32

    # proto_linear / all_linear: [TB, D] @ [D, HF] + bias   (MXU, f32 accum)
    p = jnp.dot(proto_ref[...], wp_ref[...], preferred_element_type=f32) + bp_ref[...]
    a = jnp.dot(all_ref[...], wa_ref[...], preferred_element_type=f32) + ba_ref[...]

    prod = p * a                                    # [TB, HF], factor-major layout

    # Factor-group sum.  Columns were permuted in prepare_params from
    # h*F+f -> f*H+h, so summing over factors is F static slice-adds (VPU).
    c = prod[:, 0:hidden_dim]
    for f in range(1, factor_num):
        c = c + prod[:, f * hidden_dim:(f + 1) * hidden_dim]
    c = jnp.maximum(c, 0.0)                         # relu

    # fclayer + relu: [TB, H] @ [H, O]
    c = jnp.dot(c, wfc_ref[...], preferred_element_type=f32) + bfc_ref[...]
    c = jnp.maximum(c, 0.0)

    # predictor ([TB, O] @ [O, 1]): a 1-wide MXU matmul wastes the systolic
    # array, so do broadcast-multiply + lane reduce instead.
    o = jnp.sum(c * wpr_ref[...], axis=-1, keepdims=True) + bpr_ref[...]

    # sigmoid(o * l) * (1 / divide)
    out_ref[...] = jax.nn.sigmoid(o * l) * inv_divide


def prepare_params(params, hidden_dim, factor_num, weight_dtype=jnp.float32):
    """One-time conversion from PyTorch layout ([out, in] weights) to the
    kernel layout ([in, out], factor-major columns).  Call at load time,
    not on the per-forward hot path.  Pass weight_dtype=jnp.bfloat16 to
    halve weight DMA bytes on bf16-native MXUs (v5e/v6e/v7x)."""
    wp, bp, wa, ba, wfc, bfc, wpr, bpr = params
    H, F = hidden_dim, factor_num
    hf = H * F
    # Column permutation: new column j = f*H + h takes old column h*F + f.
    j = jnp.arange(hf)
    perm = (j % H) * F + (j // H)

    wp_t = wp.T[:, perm].astype(weight_dtype)            # [D, HF]
    bp_r = bp[perm].reshape(1, -1).astype(jnp.float32)   # [1, HF]
    wa_t = wa.T[:, perm].astype(weight_dtype)            # [D, HF]
    ba_r = ba[perm].reshape(1, -1).astype(jnp.float32)   # [1, HF]
    wfc_t = wfc.T.astype(weight_dtype)                   # [H, O]
    bfc_r = bfc.reshape(1, -1).astype(jnp.float32)       # [1, O]
    wpr_r = wpr.reshape(1, -1).astype(jnp.float32)       # [1, O]
    bpr_r = bpr.reshape(1, 1).astype(jnp.float32)        # [1, 1]
    return (wp_t, bp_r, wa_t, ba_r, wfc_t, bfc_r, wpr_r, bpr_r)


def controller_forward(mean_proto, all_data, prepared, hidden_dim, factor_num,
                       l, divide, *, block_b=512, compute_dtype=jnp.float32):
    """Forward pass.  Output is [B, 1] (matches the module for B > 1)."""
    wp_t, bp_r, wa_t, ba_r, wfc_t, bfc_r, wpr_r, bpr_r = prepared
    B, D = mean_proto.shape

    # Batch tile size: multiple of 8 (sublane) unless a single full-B block.
    tb = min(int(block_b), B)
    if tb != B:
        tb = max(8, (tb // 8) * 8)
    n_blocks = pl.cdiv(B, tb)
    Bp = n_blocks * tb

    x_p = mean_proto.astype(compute_dtype)
    x_a = all_data.astype(compute_dtype)
    if Bp != B:
        x_p = jnp.pad(x_p, ((0, Bp - B), (0, 0)))
        x_a = jnp.pad(x_a, ((0, Bp - B), (0, 0)))

    kernel = partial(_controller_kernel, hidden_dim, factor_num,
                     float(l), 1.0 / float(divide))

    inp_spec = pl.BlockSpec((tb, D), lambda i: (i, 0))

    def rep_spec(arr):
        # Small weight/bias arrays: whole array every grid step (stays in VMEM).
        return pl.BlockSpec(arr.shape, lambda i: (0, 0))

    out = pl.pallas_call(
        kernel,
        out_shape=jax.ShapeDtypeStruct((Bp, 1), jnp.float32),
        grid=(n_blocks,),
        in_specs=[inp_spec, inp_spec,
                  rep_spec(wp_t), rep_spec(bp_r),
                  rep_spec(wa_t), rep_spec(ba_r),
                  rep_spec(wfc_t), rep_spec(bfc_r),
                  rep_spec(wpr_r), rep_spec(bpr_r)],
        out_specs=pl.BlockSpec((tb, 1), lambda i: (i, 0)),
        compiler_params=pltpu.CompilerParams(
            dimension_semantics=("parallel",)),
    )(x_p, x_a, wp_t, bp_r, wa_t, ba_r, wfc_t, bfc_r, wpr_r, bpr_r)

    return out[:B]


def init_params(key, backbone_input_dim, hidden_dim, output_dim, factor_num):
    hf = hidden_dim * factor_num
    keys = jax.random.split(key, 8)

    def xavier_normal(k, out_d, in_d):
        std = (2.0 / (in_d + out_d)) ** 0.5
        return std * jax.random.normal(k, (out_d, in_d), jnp.float32)

    def uniform_bias(k, out_d, in_d):
        bound = 1.0 / (in_d ** 0.5)
        return jax.random.uniform(k, (out_d,), jnp.float32, -bound, bound)

    wp = xavier_normal(keys[0], hf, backbone_input_dim)
    bp = uniform_bias(keys[1], hf, backbone_input_dim)
    wa = xavier_normal(keys[2], hf, backbone_input_dim)
    ba = uniform_bias(keys[3], hf, backbone_input_dim)
    wfc = 0.1 * jax.random.normal(keys[4], (output_dim, hidden_dim), jnp.float32)
    bfc = uniform_bias(keys[5], output_dim, hidden_dim)
    wpr = 0.1 * jax.random.normal(keys[6], (1, output_dim), jnp.float32)
    bpr = uniform_bias(keys[7], 1, output_dim)
    return (wp, bp, wa, ba, wfc, bfc, wpr, bpr)


def reference_forward(mean_proto, all_data, params, hidden_dim, factor_num,
                      l, divide):
    wp, bp, wa, ba, wfc, bfc, wpr, bpr = params
    p = mean_proto @ wp.T + bp
    a = all_data @ wa.T + ba
    c = (p * a).reshape(-1, hidden_dim, factor_num).sum(axis=2)
    c = jnp.maximum(c, 0.0)
    c = jnp.maximum(c @ wfc.T + bfc, 0.0)
    o = c @ wpr.T + bpr
    return jax.nn.sigmoid(o * l) / divide


if __name__ == "__main__":
    # Small, forward-consistent shapes; B=16 with block_b=8 exercises the grid.
    B = 16
    backbone_input_dim = 32
    hidden_dim = 32
    output_dim = 16
    factor_num = 4        # HF = 128 -> lane-aligned factor slices
    l = 2.0
    divide = 3.0

    key = jax.random.PRNGKey(0)
    k_in1, k_in2, k_params = jax.random.split(key, 3)

    mean_proto = jax.random.normal(k_in1, (B, backbone_input_dim), jnp.float32)
    all_data = jax.random.normal(k_in2, (B, backbone_input_dim), jnp.float32)
    params = init_params(k_params, backbone_input_dim, hidden_dim,
                         output_dim, factor_num)

    # One-time parameter preparation (transpose + factor-major permutation).
    prepared = prepare_params(params, hidden_dim, factor_num,
                              weight_dtype=jnp.float32)

    out = controller_forward(mean_proto, all_data, prepared,
                             hidden_dim, factor_num, l, divide, block_b=8)
    out = jax.block_until_ready(out)

    ref = reference_forward(mean_proto, all_data, params,
                            hidden_dim, factor_num, l, divide)

    assert out.shape == (B, 1), out.shape
    assert jnp.allclose(out, ref, atol=1e-5, rtol=1e-5), (out, ref)
    print("KERNEL_OK")
</pallas_src>

<mosaic_0001>
module attributes {stable_mosaic.version = 11 : i64} {
  func.func @_controller_kernel(%arg0: i32, %arg1: memref<8x32xf32, #tpu.memory_space<vmem>>, %arg2: memref<8x32xf32, #tpu.memory_space<vmem>>, %arg3: memref<32x128xf32, #tpu.memory_space<vmem>>, %arg4: memref<1x128xf32, #tpu.memory_space<vmem>>, %arg5: memref<32x128xf32, #tpu.memory_space<vmem>>, %arg6: memref<1x128xf32, #tpu.memory_space<vmem>>, %arg7: memref<32x16xf32, #tpu.memory_space<vmem>>, %arg8: memref<1x16xf32, #tpu.memory_space<vmem>>, %arg9: memref<1x16xf32, #tpu.memory_space<vmem>>, %arg10: memref<1x1xf32, #tpu.memory_space<vmem>>, %arg11: memref<8x1xf32, #tpu.memory_space<vmem>>) attributes {dimension_semantics = [#tpu.dimension_semantics<parallel>], iteration_bounds = array<i64: 2>, scalar_prefetch = 0 : i64, scratch_operands = 0 : i64, tpu.core_type = #tpu.core_type<tc>, window_params = [{transform_indices = @transform_0, window_bounds = array<i64: 8, 32>}, {transform_indices = @transform_1, window_bounds = array<i64: 8, 32>}, {pipeline_mode = #tpu.pipeline_mode<synchronous>, transform_indices = @transform_2, window_bounds = array<i64: 32, 128>}, {pipeline_mode = #tpu.pipeline_mode<synchronous>, transform_indices = @transform_3, window_bounds = array<i64: 1, 128>}, {pipeline_mode = #tpu.pipeline_mode<synchronous>, transform_indices = @transform_4, window_bounds = array<i64: 32, 128>}, {pipeline_mode = #tpu.pipeline_mode<synchronous>, transform_indices = @transform_5, window_bounds = array<i64: 1, 128>}, {pipeline_mode = #tpu.pipeline_mode<synchronous>, transform_indices = @transform_6, window_bounds = array<i64: 32, 16>}, {pipeline_mode = #tpu.pipeline_mode<synchronous>, transform_indices = @transform_7, window_bounds = array<i64: 1, 16>}, {pipeline_mode = #tpu.pipeline_mode<synchronous>, transform_indices = @transform_8, window_bounds = array<i64: 1, 16>}, {pipeline_mode = #tpu.pipeline_mode<synchronous>, transform_indices = @transform_9, window_bounds = array<i64: 1, 1>}, {transform_indices = @transform_10, window_bounds = array<i64: 8, 1>}]} {
    %c0 = arith.constant 0 : index
    %c0_0 = arith.constant 0 : index
    %0 = vector.load %arg1[%c0, %c0_0] : memref<8x32xf32, #tpu.memory_space<vmem>>, vector<8x32xf32>
    %c0_1 = arith.constant 0 : index
    %c0_2 = arith.constant 0 : index
    %1 = vector.load %arg3[%c0_1, %c0_2] : memref<32x128xf32, #tpu.memory_space<vmem>>, vector<32x128xf32>
    %cst = arith.constant dense<0.000000e+00> : vector<8x128xf32>
    %2 = tpu.matmul %0, %1, %cst {dimension_numbers = #tpu.dot_dimension_numbers<[1], [0], [0], [1], [0, 0, 1, 1], [], []>} : vector<8x32xf32>, vector<32x128xf32>, vector<8x128xf32> -> vector<8x128xf32>
    %c0_3 = arith.constant 0 : index
    %c0_4 = arith.constant 0 : index
    %3 = vector.load %arg4[%c0_3, %c0_4] : memref<1x128xf32, #tpu.memory_space<vmem>>, vector<1x128xf32>
    %4 = vector.broadcast %3 : vector<1x128xf32> to vector<8x128xf32>
    %5 = arith.addf %2, %4 : vector<8x128xf32>
    %c0_5 = arith.constant 0 : index
    %c0_6 = arith.constant 0 : index
    %6 = vector.load %arg2[%c0_5, %c0_6] : memref<8x32xf32, #tpu.memory_space<vmem>>, vector<8x32xf32>
    %c0_7 = arith.constant 0 : index
    %c0_8 = arith.constant 0 : index
    %7 = vector.load %arg5[%c0_7, %c0_8] : memref<32x128xf32, #tpu.memory_space<vmem>>, vector<32x128xf32>
    %cst_9 = arith.constant dense<0.000000e+00> : vector<8x128xf32>
    %8 = tpu.matmul %6, %7, %cst_9 {dimension_numbers = #tpu.dot_dimension_numbers<[1], [0], [0], [1], [0, 0, 1, 1], [], []>} : vector<8x32xf32>, vector<32x128xf32>, vector<8x128xf32> -> vector<8x128xf32>
    %c0_10 = arith.constant 0 : index
    %c0_11 = arith.constant 0 : index
    %9 = vector.load %arg6[%c0_10, %c0_11] : memref<1x128xf32, #tpu.memory_space<vmem>>, vector<1x128xf32>
    %10 = vector.broadcast %9 : vector<1x128xf32> to vector<8x128xf32>
    %11 = arith.addf %8, %10 : vector<8x128xf32>
    %12 = arith.mulf %5, %11 : vector<8x128xf32>
    %13 = vector.extract_strided_slice %12 {offsets = [0, 0], sizes = [8, 32], strides = [1, 1]} : vector<8x128xf32> to vector<8x32xf32>
    %14 = vector.extract_strided_slice %12 {offsets = [0, 32], sizes = [8, 32], strides = [1, 1]} : vector<8x128xf32> to vector<8x32xf32>
    %15 = arith.addf %13, %14 : vector<8x32xf32>
    %16 = vector.extract_strided_slice %12 {offsets = [0, 64], sizes = [8, 32], strides = [1, 1]} : vector<8x128xf32> to vector<8x32xf32>
    %17 = arith.addf %15, %16 : vector<8x32xf32>
    %18 = vector.extract_strided_slice %12 {offsets = [0, 96], sizes = [8, 32], strides = [1, 1]} : vector<8x128xf32> to vector<8x32xf32>
    %19 = arith.addf %17, %18 : vector<8x32xf32>
    %cst_12 = arith.constant 0.000000e+00 : f32
    %20 = vector.broadcast %cst_12 : f32 to vector<8x32xf32>
    %21 = arith.maximumf %19, %20 : vector<8x32xf32>
    %c0_13 = arith.constant 0 : index
    %c0_14 = arith.constant 0 : index
    %22 = vector.load %arg7[%c0_13, %c0_14] : memref<32x16xf32, #tpu.memory_space<vmem>>, vector<32x16xf32>
    %cst_15 = arith.constant dense<0.000000e+00> : vector<8x16xf32>
    %23 = tpu.matmul %21, %22, %cst_15 {dimension_numbers = #tpu.dot_dimension_numbers<[1], [0], [0], [1], [0, 0, 1, 1], [], []>} : vector<8x32xf32>, vector<32x16xf32>, vector<8x16xf32> -> vector<8x16xf32>
    %c0_16 = arith.constant 0 : index
    %c0_17 = arith.constant 0 : index
    %24 = vector.load %arg8[%c0_16, %c0_17] : memref<1x16xf32, #tpu.memory_space<vmem>>, vector<1x16xf32>
    %25 = vector.broadcast %24 : vector<1x16xf32> to vector<8x16xf32>
    %26 = arith.addf %23, %25 : vector<8x16xf32>
    %cst_18 = arith.constant 0.000000e+00 : f32
    %27 = vector.broadcast %cst_18 : f32 to vector<8x16xf32>
    %28 = arith.maximumf %26, %27 : vector<8x16xf32>
    %c0_19 = arith.constant 0 : index
    %c0_20 = arith.constant 0 : index
    %29 = vector.load %arg9[%c0_19, %c0_20] : memref<1x16xf32, #tpu.memory_space<vmem>>, vector<1x16xf32>
    %30 = vector.broadcast %29 : vector<1x16xf32> to vector<8x16xf32>
    %31 = arith.mulf %28, %30 : vector<8x16xf32>
    %cst_21 = arith.constant dense<0.000000e+00> : vector<8xf32>
    %32 = vector.multi_reduction <add>, %31, %cst_21 [1] : vector<8x16xf32> to vector<8xf32>
    %33 = vector.shape_cast %32 : vector<8xf32> to vector<8x1xf32>
    %c0_22 = arith.constant 0 : index
    %c0_23 = arith.constant 0 : index
    %34 = vector.load %arg10[%c0_22, %c0_23] : memref<1x1xf32, #tpu.memory_space<vmem>>, vector<1x1xf32>
    %35 = vector.broadcast %34 : vector<1x1xf32> to vector<8x1xf32>
    %36 = arith.addf %33, %35 : vector<8x1xf32>
    %cst_24 = arith.constant 2.000000e+00 : f32
    %37 = vector.broadcast %cst_24 : f32 to vector<8x1xf32>
    %38 = arith.mulf %36, %37 : vector<8x1xf32>
    %39 = arith.negf %38 : vector<8x1xf32>
    %40 = math.exp %39 : vector<8x1xf32>
    %cst_25 = arith.constant 1.000000e+00 : f32
    %41 = vector.broadcast %cst_25 : f32 to vector<8x1xf32>
    %42 = arith.addf %41, %40 : vector<8x1xf32>
    %43 = arith.divf %41, %42 : vector<8x1xf32>
    %cst_26 = arith.constant 0.333333343 : f32
    %44 = vector.broadcast %cst_26 : f32 to vector<8x1xf32>
    %45 = arith.mulf %43, %44 : vector<8x1xf32>
    %c0_27 = arith.constant 0 : index
    %c0_28 = arith.constant 0 : index
    %46 = vector.load %arg11[%c0_27, %c0_28] : memref<8x1xf32, #tpu.memory_space<vmem>>, vector<8x1xf32>
    tpu.vector_store %arg11[%c0_27, %c0_28], %45 {strides = array<i32>} : memref<8x1xf32, #tpu.memory_space<vmem>>, vector<8x1xf32>,
    return
  }
  func.func @transform_0(%arg0: i32) -> (i32, i32) {
    %c0_i32 = arith.constant 0 : i32
    %c0_i32_0 = arith.constant 0 : i32
    return %arg0, %c0_i32 : i32, i32
  }
  func.func @transform_1(%arg0: i32) -> (i32, i32) {
    %c0_i32 = arith.constant 0 : i32
    %c0_i32_0 = arith.constant 0 : i32
    return %arg0, %c0_i32 : i32, i32
  }
  func.func @transform_2(%arg0: i32) -> (i32, i32) {
    %c0_i32 = arith.constant 0 : i32
    %c0_i32_0 = arith.constant 0 : i32
    %c0_i32_1 = arith.constant 0 : i32
    return %c0_i32, %c0_i32_0 : i32, i32
  }
  func.func @transform_3(%arg0: i32) -> (i32, i32) {
    %c0_i32 = arith.constant 0 : i32
    %c0_i32_0 = arith.constant 0 : i32
    %c0_i32_1 = arith.constant 0 : i32
    return %c0_i32, %c0_i32_0 : i32, i32
  }
  func.func @transform_4(%arg0: i32) -> (i32, i32) {
    %c0_i32 = arith.constant 0 : i32
    %c0_i32_0 = arith.constant 0 : i32
    %c0_i32_1 = arith.constant 0 : i32
    return %c0_i32, %c0_i32_0 : i32, i32
  }
  func.func @transform_5(%arg0: i32) -> (i32, i32) {
    %c0_i32 = arith.constant 0 : i32
    %c0_i32_0 = arith.constant 0 : i32
    %c0_i32_1 = arith.constant 0 : i32
    return %c0_i32, %c0_i32_0 : i32, i32
  }
  func.func @transform_6(%arg0: i32) -> (i32, i32) {
    %c0_i32 = arith.constant 0 : i32
    %c0_i32_0 = arith.constant 0 : i32
    %c0_i32_1 = arith.constant 0 : i32
    return %c0_i32, %c0_i32_0 : i32, i32
  }
  func.func @transform_7(%arg0: i32) -> (i32, i32) {
    %c0_i32 = arith.constant 0 : i32
    %c0_i32_0 = arith.constant 0 : i32
    %c0_i32_1 = arith.constant 0 : i32
    return %c0_i32, %c0_i32_0 : i32, i32
  }
  func.func @transform_8(%arg0: i32) -> (i32, i32) {
    %c0_i32 = arith.constant 0 : i32
    %c0_i32_0 = arith.constant 0 : i32
    %c0_i32_1 = arith.constant 0 : i32
    return %c0_i32, %c0_i32_0 : i32, i32
  }
  func.func @transform_9(%arg0: i32) -> (i32, i32) {
    %c0_i32 = arith.constant 0 : i32
    %c0_i32_0 = arith.constant 0 : i32
    %c0_i32_1 = arith.constant 0 : i32
    return %c0_i32, %c0_i32_0 : i32, i32
  }
  func.func @transform_10(%arg0: i32) -> (i32, i32) {
    %c0_i32 = arith.constant 0 : i32
    %c0_i32_0 = arith.constant 0 : i32
    return %arg0, %c0_i32 : i32, i32
  }
}

</mosaic_0001>

<llo_original>
// kernel: tpu_custom_call.1
$region0: #{tpu_custom_call.1}
  #allocation0 [shape = 'u32[]', space=smem, size = 0x4, offset = 0x4, fixed_abs, tag = 'smem constant byte address 0x4 - core index']
  #allocation1 [shape = 'u32[144,128]{1,0:T(1,128)}', space=vmem, size = 0x12000, scoped, tag = 'internal scratch']
  #allocation2 [shape = 'f32[1,1]{1,0:T(1,128)S(1)}', space=vmem, size = 0x200, scoped, tag = 'scoped memory for tpu_custom_call.1']
  %s0 = inlined_call_operand.hbm [shape: f32[16,32], index: 0, kind: input, shape index: {}]
  %s1 = inlined_call_operand.hbm [shape: f32[16,32], index: 1, kind: input, shape index: {}]
  %s2 = inlined_call_operand.vmem [shape: f32[32,128], index: 2, kind: input, shape index: {}]
  %s3 = inlined_call_operand.vmem [shape: f32[1,128], index: 3, kind: input, shape index: {}]
  %s4 = inlined_call_operand.vmem [shape: f32[32,128], index: 4, kind: input, shape index: {}]
  %s5 = inlined_call_operand.vmem [shape: f32[1,128], index: 5, kind: input, shape index: {}]
  %s6 = inlined_call_operand.vmem [shape: f32[32,16], index: 6, kind: input, shape index: {}]
  %s7 = inlined_call_operand.vmem [shape: f32[1,16], index: 7, kind: input, shape index: {}]
  %s8 = inlined_call_operand.vmem [shape: f32[1,16], index: 8, kind: input, shape index: {}]
  %s9 = inlined_call_operand.<no memory space> [shape: f32[1,1], index: 9, kind: input, shape index: {}]
  %s10 = inlined_call_operand.vmem [shape: f32[16,1], index: 10, kind: output, shape index: {}]
  %s11 = sld [smem:[#allocation0]]
  $region81: #{tpu_custom_call.1} parent=0
    _
  %s13 = ssub.s32 1, %s11
  %s14 = scalar_select 0, %s13, %s11
  %v15 = vstv %s9
  %16 = vst [vmem:[#allocation2] sm:$0x1] %v15
  $region1: #{tpu_custom_call.1} parent=0
    #allocation3 [shape = 'u8[8192]{0}', space=vmem, size = 0x2000, scoped, tag = 'input window, operand 0']
    #allocation4 [shape = 's32[2]{0}', space=sflag, size = 0x8, scoped, tag = 'scoped memory for tpu_custom_call.1']
    #allocation5 [shape = 'u8[8192]{0}', space=vmem, size = 0x2000, scoped, tag = 'input window, operand 1']
    #allocation6 [shape = 's32[2]{0}', space=sflag, size = 0x8, scoped, tag = 'scoped memory for tpu_custom_call.1']
    %17 = vsyncpa [#allocation4], 0
    %s18 = scalar_lea.sflag [#allocation4], 1
    %19 = vsyncpa %s18, 0
    %20 = vsyncpa [#allocation6], 0
    %s21 = scalar_lea.sflag [#allocation6], 1
    %22 = vsyncpa %s21, 0
    loop: start=0, step=1, limit=4
    $region2: #{tpu_custom_call.1} parent=1 // loop_pre_header
      _
    $region3: #{tpu_custom_call.1} parent=1 // loop_header
      %s24 = sphi 0, %s28
      %p25 = scmp.ge.s32.totalorder %s24, 4
      %s34 = sphi 0, %s36
      %s37 = sphi 0, %s34
      %s38 = sphi 0, %s37
      %s54 = sphi 0, %s38
      %s60 = sphi 0, %s62
      %s63 = sphi 0, %s60
      %s64 = sphi 0, %s63
      %s80 = sphi 0, %s64
      %s84 = sphi 0, %s84
      %s86 = sphi 0, %s84
      %s87 = sphi 0, %s86
      %s101 = sphi 0, %s87
      %s105 = sphi 0, %s105
      %s107 = sphi 0, %s105
      %s108 = sphi 0, %s107
      %s122 = sphi 0, %s108
      %s126 = sphi 0, %s126
      %s128 = sphi 0, %s126
      %s129 = sphi 0, %s128
      %s143 = sphi 0, %s129
      %s147 = sphi 0, %s147
      %s149 = sphi 0, %s147
      %s150 = sphi 0, %s149
      %s164 = sphi 0, %s150
      %s168 = sphi 0, %s168
      %s170 = sphi 0, %s168
      %s171 = sphi 0, %s170
      %s185 = sphi 0, %s171
      %s189 = sphi 0, %s189
      %s191 = sphi 0, %s189
      %s192 = sphi 0, %s191
      %s206 = sphi 0, %s192
      %s210 = sphi 0, %s210
      %s212 = sphi 0, %s210
      %s213 = sphi 0, %s212
      %s227 = sphi 0, %s213
      %s231 = sphi 0, %s231
      %s233 = sphi 0, %s231
      %s234 = sphi 0, %s233
      %s248 = sphi 0, %s234
      %s254 = sphi 0, %s256
      %s257 = sphi 0, %s254
      %s258 = sphi 0, %s257
      %s274 = sphi 0, %s258
    $region4: #{tpu_custom_call.1} parent=1 // loop_header_branch
      %27 = sbr.rel (%p25) target = $region8
    $region5: #{tpu_custom_call.1} parent=1 // loop_body
      %s29 = ssub.s32 %s24, 1
      %s30 = ssub.s32 %s24, 2
      %s31 = sadd.s32 %s24, 1
      %s32 = ssub.s32 %s24, %s31
      %p33 = scmp.eq.s32.totalorder %s32, 0
      %s35 = sadd.s32 %s34, 1
      %s36 = scalar_select %p33, %s34, %s35
      %p39 = pneg %p33
      %p40 = scmp.eq.s32.totalorder %s24, 1
      %p41 = por %p39, %p40
      %p42 = scmp.ne.s32.totalorder %s34, %s37
      %p43 = scmp.eq.s32.totalorder %s24, 0
      %p44 = por %p42, %p43
      %p45 = scmp.ne.s32.totalorder %s34, %s37
      %p46 = scmp.eq.s32.totalorder %s29, 1
      %p47 = por %p45, %p46
      %p48 = scmp.ne.s32.totalorder %s37, %s38
      %p49 = scmp.eq.s32.totalorder %s29, 0
      %p50 = por %p48, %p49
      %p51 = scmp.ne.s32.totalorder %s37, %s38
      %p52 = scmp.eq.s32.totalorder %s30, 1
      %p53 = por %p51, %p52
      %p55 = scmp.ne.s32.totalorder %s38, %s54
      %p56 = scmp.eq.s32.totalorder %s30, 0
      %p57 = por %p55, %p56
      %s58 = ssub.s32 %s24, %s31
      %p59 = scmp.eq.s32.totalorder %s58, 0
      %s61 = sadd.s32 %s60, 1
      %s62 = scalar_select %p59, %s60, %s61
      %p65 = pneg %p59
      %p66 = scmp.eq.s32.totalorder %s24, 1
      %p67 = por %p65, %p66
      %p68 = scmp.ne.s32.totalorder %s60, %s63
      %p69 = scmp.eq.s32.totalorder %s24, 0
      %p70 = por %p68, %p69
      %p71 = scmp.ne.s32.totalorder %s60, %s63
      %p72 = scmp.eq.s32.totalorder %s29, 1
      %p73 = por %p71, %p72
      %p74 = scmp.ne.s32.totalorder %s63, %s64
      %p75 = scmp.eq.s32.totalorder %s29, 0
      %p76 = por %p74, %p75
      %p77 = scmp.ne.s32.totalorder %s63, %s64
      %p78 = scmp.eq.s32.totalorder %s30, 1
      %p79 = por %p77, %p78
      %p81 = scmp.ne.s32.totalorder %s64, %s80
      %p82 = scmp.eq.s32.totalorder %s30, 0
      %p83 = por %p81, %p82
      %s85 = sadd.s32 %s84, 1
      %p88 = scmp.eq.s32.totalorder %s24, 1
      %p89 = scmp.ne.s32.totalorder %s84, %s86
      %p90 = scmp.eq.s32.totalorder %s24, 0
      %p91 = por %p89, %p90
      %p92 = scmp.ne.s32.totalorder %s84, %s86
      %p93 = scmp.eq.s32.totalorder %s29, 1
      %p94 = por %p92, %p93
      %p95 = scmp.ne.s32.totalorder %s86, %s87
      %p96 = scmp.eq.s32.totalorder %s29, 0
      %p97 = por %p95, %p96
      %p98 = scmp.ne.s32.totalorder %s86, %s87
      %p99 = scmp.eq.s32.totalorder %s30, 1
      %p100 = por %p98, %p99
      %p102 = scmp.ne.s32.totalorder %s87, %s101
      %p103 = scmp.eq.s32.totalorder %s30, 0
      %p104 = por %p102, %p103
      %s106 = sadd.s32 %s105, 1
      %p109 = scmp.eq.s32.totalorder %s24, 1
      %p110 = scmp.ne.s32.totalorder %s105, %s107
      %p111 = scmp.eq.s32.totalorder %s24, 0
      %p112 = por %p110, %p111
      %p113 = scmp.ne.s32.totalorder %s105, %s107
      %p114 = scmp.eq.s32.totalorder %s29, 1
      %p115 = por %p113, %p114
      %p116 = scmp.ne.s32.totalorder %s107, %s108
      %p117 = scmp.eq.s32.totalorder %s29, 0
      %p118 = por %p116, %p117
      %p119 = scmp.ne.s32.totalorder %s107, %s108
      %p120 = scmp.eq.s32.totalorder %s30, 1
      %p121 = por %p119, %p120
      %p123 = scmp.ne.s32.totalorder %s108, %s122
      %p124 = scmp.eq.s32.totalorder %s30, 0
      %p125 = por %p123, %p124
      %s127 = sadd.s32 %s126, 1
      %p130 = scmp.eq.s32.totalorder %s24, 1
      %p131 = scmp.ne.s32.totalorder %s126, %s128
      %p132 = scmp.eq.s32.totalorder %s24, 0
      %p133 = por %p131, %p132
      %p134 = scmp.ne.s32.totalorder %s126, %s128
      %p135 = scmp.eq.s32.totalorder %s29, 1
      %p136 = por %p134, %p135
      %p137 = scmp.ne.s32.totalorder %s128, %s129
      %p138 = scmp.eq.s32.totalorder %s29, 0
      %p139 = por %p137, %p138
      %p140 = scmp.ne.s32.totalorder %s128, %s129
      %p141 = scmp.eq.s32.totalorder %s30, 1
      %p142 = por %p140, %p141
      %p144 = scmp.ne.s32.totalorder %s129, %s143
      %p145 = scmp.eq.s32.totalorder %s30, 0
      %p146 = por %p144, %p145
      %s148 = sadd.s32 %s147, 1
      %p151 = scmp.eq.s32.totalorder %s24, 1
      %p152 = scmp.ne.s32.totalorder %s147, %s149
      %p153 = scmp.eq.s32.totalorder %s24, 0
      %p154 = por %p152, %p153
      %p155 = scmp.ne.s32.totalorder %s147, %s149
      %p156 = scmp.eq.s32.totalorder %s29, 1
      %p157 = por %p155, %p156
      %p158 = scmp.ne.s32.totalorder %s149, %s150
      %p159 = scmp.eq.s32.totalorder %s29, 0
      %p160 = por %p158, %p159
      %p161 = scmp.ne.s32.totalorder %s149, %s150
      %p162 = scmp.eq.s32.totalorder %s30, 1
      %p163 = por %p161, %p162
      %p165 = scmp.ne.s32.totalorder %s150, %s164
      %p166 = scmp.eq.s32.totalorder %s30, 0
      %p167 = por %p165, %p166
      %s169 = sadd.s32 %s168, 1
      %p172 = scmp.eq.s32.totalorder %s24, 1
      %p173 = scmp.ne.s32.totalorder %s168, %s170
      %p174 = scmp.eq.s32.totalorder %s24, 0
      %p175 = por %p173, %p174
      %p176 = scmp.ne.s32.totalorder %s168, %s170
      %p177 = scmp.eq.s32.totalorder %s29, 1
      %p178 = por %p176, %p177
      %p179 = scmp.ne.s32.totalorder %s170, %s171
      %p180 = scmp.eq.s32.totalorder %s29, 0
      %p181 = por %p179, %p180
      %p182 = scmp.ne.s32.totalorder %s170, %s171
      %p183 = scmp.eq.s32.totalorder %s30, 1
      %p184 = por %p182, %p183
      %p186 = scmp.ne.s32.totalorder %s171, %s185
      %p187 = scmp.eq.s32.totalorder %s30, 0
      %p188 = por %p186, %p187
      %s190 = sadd.s32 %s189, 1
      %p193 = scmp.eq.s32.totalorder %s24, 1
      %p194 = scmp.ne.s32.totalorder %s189, %s191
      %p195 = scmp.eq.s32.totalorder %s24, 0
      %p196 = por %p194, %p195
      %p197 = scmp.ne.s32.totalorder %s189, %s191
      %p198 = scmp.eq.s32.totalorder %s29, 1
      %p199 = por %p197, %p198
      %p200 = scmp.ne.s32.totalorder %s191, %s192
      %p201 = scmp.eq.s32.totalorder %s29, 0
      %p202 = por %p200, %p201
      %p203 = scmp.ne.s32.totalorder %s191, %s192
      %p204 = scmp.eq.s32.totalorder %s30, 1
      %p205 = por %p203, %p204
      %p207 = scmp.ne.s32.totalorder %s192, %s206
      %p208 = scmp.eq.s32.totalorder %s30, 0
      %p209 = por %p207, %p208
      %s211 = sadd.s32 %s210, 1
      %p214 = scmp.eq.s32.totalorder %s24, 1
      %p215 = scmp.ne.s32.totalorder %s210, %s212
      %p216 = scmp.eq.s32.totalorder %s24, 0
      %p217 = por %p215, %p216
      %p218 = scmp.ne.s32.totalorder %s210, %s212
      %p219 = scmp.eq.s32.totalorder %s29, 1
      %p220 = por %p218, %p219
      %p221 = scmp.ne.s32.totalorder %s212, %s213
      %p222 = scmp.eq.s32.totalorder %s29, 0
      %p223 = por %p221, %p222
      %p224 = scmp.ne.s32.totalorder %s212, %s213
      %p225 = scmp.eq.s32.totalorder %s30, 1
      %p226 = por %p224, %p225
      %p228 = scmp.ne.s32.totalorder %s213, %s227
      %p229 = scmp.eq.s32.totalorder %s30, 0
      %p230 = por %p228, %p229
      %s232 = sadd.s32 %s231, 1
      %p235 = scmp.eq.s32.totalorder %s24, 1
      %p236 = scmp.ne.s32.totalorder %s231, %s233
      %p237 = scmp.eq.s32.totalorder %s24, 0
      %p238 = por %p236, %p237
      %p239 = scmp.ne.s32.totalorder %s231, %s233
      %p240 = scmp.eq.s32.totalorder %s29, 1
      %p241 = por %p239, %p240
      %p242 = scmp.ne.s32.totalorder %s233, %s234
      %p243 = scmp.eq.s32.totalorder %s29, 0
      %p244 = por %p242, %p243
      %p245 = scmp.ne.s32.totalorder %s233, %s234
      %p246 = scmp.eq.s32.totalorder %s30, 1
      %p247 = por %p245, %p246
      %p249 = scmp.ne.s32.totalorder %s234, %s248
      %p250 = scmp.eq.s32.totalorder %s30, 0
      %p251 = por %p249, %p250
      %s252 = ssub.s32 %s24, %s31
      %p253 = scmp.eq.s32.totalorder %s252, 0
      %s255 = sadd.s32 %s254, 1
      %s256 = scalar_select %p253, %s254, %s255
      %p259 = pneg %p253
      %p260 = scmp.eq.s32.totalorder %s24, 1
      %p261 = por %p259, %p260
      %p262 = scmp.ne.s32.totalorder %s254, %s257
      %p263 = scmp.eq.s32.totalorder %s24, 0
      %p264 = por %p262, %p263
      %p265 = scmp.ne.s32.totalorder %s254, %s257
      %p266 = scmp.eq.s32.totalorder %s29, 1
      %p267 = por %p265, %p266
      %p268 = scmp.ne.s32.totalorder %s257, %s258
      %p269 = scmp.eq.s32.totalorder %s29, 0
      %p270 = por %p268, %p269
      %p271 = scmp.ne.s32.totalorder %s257, %s258
      %p272 = scmp.eq.s32.totalorder %s30, 1
      %p273 = por %p271, %p272
      %p275 = scmp.ne.s32.totalorder %s258, %s274
      %p276 = scmp.eq.s32.totalorder %s30, 0
      %p277 = por %p275, %p276
      %p278 = scmp.le.s32.totalorder 1, %s24
      %p279 = scmp.lt.s32.totalorder %s24, 3
      %p280 = pnand %p278, %p279
      %p281 = pneg %p280
      // Predicated region
      $region9: #{tpu_custom_call.1} parent=5 // pred_check
        _
      $region10: #{tpu_custom_call.1} parent=5 // pred_check_branch
        %283 = sbr.rel (%p280) target = $region12
      $region11: #{tpu_custom_call.1} parent=5 // pred_region
        %s284 = ssub.s32 %s24, 1
        // Predicated region
        $region13: #{tpu_custom_call.1} parent=11 // pred_check
          %p285 = pneg %p97
        $region14: #{tpu_custom_call.1} parent=11 // pred_check_branch
          %287 = sbr.rel (%p285) target = $region16
        $region15: #{tpu_custom_call.1} parent=11 // pred_region
          _
        $region16: #{tpu_custom_call.1} parent=11 // pred_fallthru
          _
        // Predicated region
        $region17: #{tpu_custom_call.1} parent=11 // pred_check
          %p288 = pneg %p118
        $region18: #{tpu_custom_call.1} parent=11 // pred_check_branch
          %290 = sbr.rel (%p288) target = $region20
        $region19: #{tpu_custom_call.1} parent=11 // pred_region
          _
        $region20: #{tpu_custom_call.1} parent=11 // pred_fallthru
          _
        // Predicated region
        $region21: #{tpu_custom_call.1} parent=11 // pred_check
          %p291 = pneg %p139
        $region22: #{tpu_custom_call.1} parent=11 // pred_check_branch
          %293 = sbr.rel (%p291) target = $region24
        $region23: #{tpu_custom_call.1} parent=11 // pred_region
          _
        $region24: #{tpu_custom_call.1} parent=11 // pred_fallthru
          _
        // Predicated region
        $region25: #{tpu_custom_call.1} parent=11 // pred_check
          %p294 = pneg %p160
        $region26: #{tpu_custom_call.1} parent=11 // pred_check_branch
          %296 = sbr.rel (%p294) target = $region28
        $region27: #{tpu_custom_call.1} parent=11 // pred_region
          _
        $region28: #{tpu_custom_call.1} parent=11 // pred_fallthru
          _
        // Predicated region
        $region29: #{tpu_custom_call.1} parent=11 // pred_check
          %p297 = pneg %p181
        $region30: #{tpu_custom_call.1} parent=11 // pred_check_branch
          %299 = sbr.rel (%p297) target = $region32
        $region31: #{tpu_custom_call.1} parent=11 // pred_region
          _
        $region32: #{tpu_custom_call.1} parent=11 // pred_fallthru
          _
        // Predicated region
        $region33: #{tpu_custom_call.1} parent=11 // pred_check
          %p300 = pneg %p202
        $region34: #{tpu_custom_call.1} parent=11 // pred_check_branch
          %302 = sbr.rel (%p300) target = $region36
        $region35: #{tpu_custom_call.1} parent=11 // pred_region
          _
        $region36: #{tpu_custom_call.1} parent=11 // pred_fallthru
          _
        // Predicated region
        $region37: #{tpu_custom_call.1} parent=11 // pred_check
          %p303 = pneg %p223
        $region38: #{tpu_custom_call.1} parent=11 // pred_check_branch
          %305 = sbr.rel (%p303) target = $region40
        $region39: #{tpu_custom_call.1} parent=11 // pred_region
          _
        $region40: #{tpu_custom_call.1} parent=11 // pred_fallthru
          _
        // Predicated region
        $region41: #{tpu_custom_call.1} parent=11 // pred_check
          %p306 = pneg %p244
        $region42: #{tpu_custom_call.1} parent=11 // pred_check_branch
          %308 = sbr.rel (%p306) target = $region44
        $region43: #{tpu_custom_call.1} parent=11 // pred_region
          _
        $region44: #{tpu_custom_call.1} parent=11 // pred_fallthru
          _
      $region12: #{tpu_custom_call.1} parent=5 // pred_fallthru
        _
      %p309 = scmp.lt.s32.totalorder %s24, 2
      // Predicated region
      $region45: #{tpu_custom_call.1} parent=5 // pred_check
        %p310 = pneg %p309
      $region46: #{tpu_custom_call.1} parent=5 // pred_check_branch
        %312 = sbr.rel (%p310) target = $region48
      $region47: #{tpu_custom_call.1} parent=5 // pred_region
        // Predicated region
        $region49: #{tpu_custom_call.1} parent=47 // pred_check
          %p313 = pneg %p44
        $region50: #{tpu_custom_call.1} parent=47 // pred_check_branch
          %315 = sbr.rel (%p313) target = $region52
        $region51: #{tpu_custom_call.1} parent=47 // pred_region
          %s316 = sand.u32 %s34, 1
          %s317 = scalar_lea.sflag [#allocation4], %s316
          %s318 = sand.u32 %s34, 1
          %s319 = smul.addr %s318, 8
          %s320 = scalar_lea.vmem [#allocation3], %s319
          %s322 = ssub.s32 128, 128
          %323 = vsyncadd %s317, %s322
          %s324 = smul.addr %s24, 128
          %s325 = scalar_lea.hbm %s0, %s324
          %s327 = sshll.u32 %s320, 4
          %s328 = int_to_ptr.vmem [resolvable:$true] %s327
          %330 = dma.hbm_to_vmem [thread:$0]  %s325, 128, %s328, %s317
        $region52: #{tpu_custom_call.1} parent=47 // pred_fallthru
          _
        // Predicated region
        $region53: #{tpu_custom_call.1} parent=47 // pred_check
          %p331 = pneg %p70
        $region54: #{tpu_custom_call.1} parent=47 // pred_check_branch
          %333 = sbr.rel (%p331) target = $region56
        $region55: #{tpu_custom_call.1} parent=47 // pred_region
          %s334 = sand.u32 %s60, 1
          %s335 = scalar_lea.sflag [#allocation6], %s334
          %s336 = sand.u32 %s60, 1
          %s337 = smul.addr %s336, 8
          %s338 = scalar_lea.vmem [#allocation5], %s337
          %s340 = ssub.s32 128, 128
          %341 = vsyncadd %s335, %s340
          %s342 = smul.addr %s24, 128
          %s343 = scalar_lea.hbm %s1, %s342
          %s345 = sshll.u32 %s338, 4
          %s346 = int_to_ptr.vmem [resolvable:$true] %s345
          %348 = dma.hbm_to_vmem [thread:$0]  %s343, 128, %s346, %s335
        $region56: #{tpu_custom_call.1} parent=47 // pred_fallthru
          _
      $region48: #{tpu_custom_call.1} parent=5 // pred_fallthru
        _
      %p349 = scmp.le.s32.totalorder 1, %s24
      %p350 = scmp.lt.s32.totalorder %s24, 3
      %p351 = pnand %p349, %p350
      %p352 = pneg %p351
      // Predicated region
      $region57: #{tpu_custom_call.1} parent=5 // pred_check
        _
      $region58: #{tpu_custom_call.1} parent=5 // pred_check_branch
        %354 = sbr.rel (%p351) target = $region60
      $region59: #{tpu_custom_call.1} parent=5 // pred_region
        %s355 = ssub.s32 %s24, 1
        %s356 = sand.u32 %s37, 1
        %s357 = scalar_lea.sflag [#allocation4], %s356
        %s358 = sand.u32 %s37, 1
        %s359 = smul.addr %s358, 8
        %s360 = scalar_lea.vmem [#allocation3], %s359
        // Predicated region
        $region61: #{tpu_custom_call.1} parent=59 // pred_check
          %p361 = pneg %p50
        $region62: #{tpu_custom_call.1} parent=59 // pred_check_branch
          %363 = sbr.rel (%p361) target = $region64
        $region63: #{tpu_custom_call.1} parent=59 // pred_region
          %364 = dma.done %s357, 128
        $region64: #{tpu_custom_call.1} parent=59 // pred_fallthru
          _
        %s365 = sand.u32 %s63, 1
        %s366 = scalar_lea.sflag [#allocation6], %s365
        %s367 = sand.u32 %s63, 1
        %s368 = smul.addr %s367, 8
        %s369 = scalar_lea.vmem [#allocation5], %s368
        // Predicated region
        $region65: #{tpu_custom_call.1} parent=59 // pred_check
          %p370 = pneg %p76
        $region66: #{tpu_custom_call.1} parent=59 // pred_check_branch
          %372 = sbr.rel (%p370) target = $region68
        $region67: #{tpu_custom_call.1} parent=59 // pred_region
          %373 = dma.done %s366, 128
        $region68: #{tpu_custom_call.1} parent=59 // pred_fallthru
          _
        %s374 = sand.u32 %s37, 1
        %s375 = scalar_lea.sflag [#allocation4], %s374
        %s376 = sand.u32 %s37, 1
        %s377 = smul.addr %s376, 8
        %s378 = scalar_lea.vmem [#allocation3], %s377
        %p379 = pneg %p50
        %p380 = pneg %p47
        %s381 = sand.u32 %s63, 1
        %s382 = scalar_lea.sflag [#allocation6], %s381
        %s383 = sand.u32 %s63, 1
        %s384 = smul.addr %s383, 8
        %s385 = scalar_lea.vmem [#allocation5], %s384
        %p386 = pneg %p76
        %p387 = pneg %p73
        %p388 = pneg %p97
        %p389 = pneg %p94
        %p390 = pneg %p118
        %p391 = pneg %p115
        %p392 = pneg %p139
        %p393 = pneg %p136
        %p394 = pneg %p160
        %p395 = pneg %p157
        %p396 = pneg %p181
        %p397 = pneg %p178
        %p398 = pneg %p202
        %p399 = pneg %p199
        %p400 = pneg %p223
        %p401 = pneg %p220
        %p402 = pneg %p244
        %p403 = pneg %p241
        %p404 = pneg %p270
        %p405 = pneg %p267
        %p406 = scmp.lt.s32.totalorder %s29, 1
        %s407 = scalar_select %p406, %s29, 1
        %s408 = smul.addr %s407, 8
        %s409 = scalar_lea.vmem %s10, %s408
        %p410 = scmp.lt.s32.totalorder %s29, 1
        %s411 = scalar_select %p410, %s29, 1
        %s412 = smul.addr %s411, 8
        %s413 = scalar_lea.vmem %s10, %s412
        %v414 = vld [vmem:[%s360] sm:$0xff]
        %v415 = vld [vmem:[%s2] sm:$0xff]
        %v416 = vld [vmem:[%s2 + $0x8] sm:$0xff]
        %v417 = vld [vmem:[%s2 + $0x10] sm:$0xff]
        %v418 = vld [vmem:[%s2 + $0x18] sm:$0xff]
        %v419 = vld [vmem:[%s3] sm:$0x1]
        %v421 = vlaneseq
        %v422 = vshrl.u32 %v421, 7
        %v423 = vsub.s32 0, %v422
        %v424 = vrot.slane %v419, %v423
        %vm426 = vcmask 261120
        %v428 = vsel %vm426, %v414, 0
        %430 = vmatprep.subr.mxu0 0.0
        %431 = vmatpush1.msra.mxu0 %v415
        %432 = vmatprep.subr.mxu0 0.0
        %433 = vmatpush1.msra.mxu0 %v416
        %434 = vmatprep.subr.mxu0 0.0
        %435 = vmatpush1.msra.mxu0 %v417
        %436 = vmatprep.subr.mxu0 0.0
        %437 = vmatpush1.msra.mxu0 %v418
        %438 = vmatprep.subr.mxu0 0.0
        %439 = vmatpush1.msra.mxu0 0.0
        %440 = vmatprep.subr.mxu0 0.0
        %441 = vmatpush1.msra.mxu0 0.0
        %442 = vmatprep.subr.mxu0 0.0
        %443 = vmatpush1.msra.mxu0 0.0
        %444 = vmatprep.subr.mxu0 0.0
        %445 = vmatpush1.msra.mxu0 0.0
        %446 = vmatprep.subr.mxu0 0.0
        %447 = vmatpush1.msra.mxu0 0.0
        %448 = vmatprep.subr.mxu0 0.0
        %449 = vmatpush1.msra.mxu0 0.0
        %450 = vmatprep.subr.mxu0 0.0
        %451 = vmatpush1.msra.mxu0 0.0
        %452 = vmatprep.subr.mxu0 0.0
        %453 = vmatpush1.msra.mxu0 0.0
        %454 = vmatprep.subr.mxu0 0.0
        %455 = vmatpush1.msra.mxu0 0.0
        %456 = vmatprep.subr.mxu0 0.0
        %457 = vmatpush1.msra.mxu0 0.0
        %458 = vmatprep.subr.mxu0 0.0
        %459 = vmatpush1.msra.mxu0 0.0
        %460 = vmatprep.subr.mxu0 0.0
        %461 = vmatpush1.msra.mxu0 0.0
        %462 = vmatprep.subr.mxu0 0.0
        %463 = vmatpush1.msra.mxu0 0.0
        %464 = vmatprep.subr.mxu0 0.0
        %465 = vmatpush1.msra.mxu0 0.0
        %466 = vmatprep.subr.mxu0 0.0
        %467 = vmatpush1.msra.mxu0 0.0
        %468 = vmatprep.subr.mxu0 0.0
        %469 = vmatpush1.msra.mxu0 0.0
        %470 = vmatprep.subr.mxu0 0.0
        %471 = vmatpush1.msra.mxu0 0.0
        %472 = vmatprep.subr.mxu0 0.0
        %473 = vmatpush1.msra.mxu0 0.0
        %474 = vmatprep.subr.mxu0 0.0
        %475 = vmatpush1.msra.mxu0 0.0
        %476 = vmatprep.subr.mxu0 0.0
        %477 = vmatpush1.msra.mxu0 0.0
        %478 = vmatprep.subr.mxu0 0.0
        %479 = vmatpush1.msra.mxu0 0.0
        %480 = vmatprep.subr.mxu0 0.0
        %481 = vmatpush1.msra.mxu0 0.0
        %482 = vmatprep.subr.mxu0 0.0
        %483 = vmatpush1.msra.mxu0 0.0
        %484 = vmatprep.subr.mxu0 0.0
        %485 = vmatpush1.msra.mxu0 0.0
        %486 = vmatprep.subr.mxu0 0.0
        %487 = vmatpush1.msra.mxu0 0.0
        %488 = vmatprep.subr.mxu0 0.0
        %489 = vmatpush1.msra.mxu0 0.0
        %490 = vmatprep.subr.mxu0 0.0
        %491 = vmatpush1.msra.mxu0 0.0
        %492 = vmatprep.subr.mxu0 0.0
        %493 = vmatpush1.msra.mxu0 0.0
        %494 = vmatprep.mubr.f32.mxu0 0.0
        %495 = vmatmul.mubr.f32.gmra.mrb[0].mxu0 %v428
        %v496 = vpop.f32.mrb[0].mxu0
        %v497 = vadd.f32 %v424, %v496
        %v498 = vpop.f32.mrb[0].mxu0
        %499 = vdwg.mxu0
        %v500 = vld [vmem:[%s369] sm:$0xff]
        %v501 = vld [vmem:[%s4] sm:$0xff]
        %v502 = vld [vmem:[%s4 + $0x8] sm:$0xff]
        %v503 = vld [vmem:[%s4 + $0x10] sm:$0xff]
        %v504 = vld [vmem:[%s4 + $0x18] sm:$0xff]
        %v505 = vld [vmem:[%s5] sm:$0x1]
        %v507 = vlaneseq
        %v508 = vshrl.u32 %v507, 7
        %v509 = vsub.s32 0, %v508
        %v510 = vrot.slane %v505, %v509
        %v513 = vsel %vm426, %v500, 0
        %515 = vmatprep.subr.mxu0 0.0
        %516 = vmatpush1.msra.mxu0 %v501
        %517 = vmatprep.subr.mxu0 0.0
        %518 = vmatpush1.msra.mxu0 %v502
        %519 = vmatprep.subr.mxu0 0.0
        %520 = vmatpush1.msra.mxu0 %v503
        %521 = vmatprep.subr.mxu0 0.0
        %522 = vmatpush1.msra.mxu0 %v504
        %523 = vmatprep.subr.mxu0 0.0
        %524 = vmatpush1.msra.mxu0 0.0
        %525 = vmatprep.subr.mxu0 0.0
        %526 = vmatpush1.msra.mxu0 0.0
        %527 = vmatprep.subr.mxu0 0.0
        %528 = vmatpush1.msra.mxu0 0.0
        %529 = vmatprep.subr.mxu0 0.0
        %530 = vmatpush1.msra.mxu0 0.0
        %531 = vmatprep.subr.mxu0 0.0
        %532 = vmatpush1.msra.mxu0 0.0
        %533 = vmatprep.subr.mxu0 0.0
        %534 = vmatpush1.msra.mxu0 0.0
        %535 = vmatprep.subr.mxu0 0.0
        %536 = vmatpush1.msra.mxu0 0.0
        %537 = vmatprep.subr.mxu0 0.0
        %538 = vmatpush1.msra.mxu0 0.0
        %539 = vmatprep.subr.mxu0 0.0
        %540 = vmatpush1.msra.mxu0 0.0
        %541 = vmatprep.subr.mxu0 0.0
        %542 = vmatpush1.msra.mxu0 0.0
        %543 = vmatprep.subr.mxu0 0.0
        %544 = vmatpush1.msra.mxu0 0.0
        %545 = vmatprep.subr.mxu0 0.0
        %546 = vmatpush1.msra.mxu0 0.0
        %547 = vmatprep.subr.mxu0 0.0
        %548 = vmatpush1.msra.mxu0 0.0
        %549 = vmatprep.subr.mxu0 0.0
        %550 = vmatpush1.msra.mxu0 0.0
        %551 = vmatprep.subr.mxu0 0.0
        %552 = vmatpush1.msra.mxu0 0.0
        %553 = vmatprep.subr.mxu0 0.0
        %554 = vmatpush1.msra.mxu0 0.0
        %555 = vmatprep.subr.mxu0 0.0
        %556 = vmatpush1.msra.mxu0 0.0
        %557 = vmatprep.subr.mxu0 0.0
        %558 = vmatpush1.msra.mxu0 0.0
        %559 = vmatprep.subr.mxu0 0.0
        %560 = vmatpush1.msra.mxu0 0.0
        %561 = vmatprep.subr.mxu0 0.0
        %562 = vmatpush1.msra.mxu0 0.0
        %563 = vmatprep.subr.mxu0 0.0
        %564 = vmatpush1.msra.mxu0 0.0
        %565 = vmatprep.subr.mxu0 0.0
        %566 = vmatpush1.msra.mxu0 0.0
        %567 = vmatprep.subr.mxu0 0.0
        %568 = vmatpush1.msra.mxu0 0.0
        %569 = vmatprep.subr.mxu0 0.0
        %570 = vmatpush1.msra.mxu0 0.0
        %571 = vmatprep.subr.mxu0 0.0
        %572 = vmatpush1.msra.mxu0 0.0
        %573 = vmatprep.subr.mxu0 0.0
        %574 = vmatpush1.msra.mxu0 0.0
        %575 = vmatprep.subr.mxu0 0.0
        %576 = vmatpush1.msra.mxu0 0.0
        %577 = vmatprep.subr.mxu0 0.0
        %578 = vmatpush1.msra.mxu0 0.0
        %579 = vmatprep.mubr.f32.mxu0 0.0
        %580 = vmatmul.mubr.f32.gmra.mrb[0].mxu0 %v513
        %v581 = vpop.f32.mrb[0].mxu0
        %v582 = vadd.f32 %v510, %v581
        %v583 = vpop.f32.mrb[0].mxu0
        %584 = vdwg.mxu0
        %v585 = vmul.f32 %v497, %v582
        %587 = vrot.lane.b32.xlu0 %v585, 96
        %v588 = vpop.permute.xlu0 %587
        %v590 = vadd.f32 %v585, %v588
        %591 = vrot.lane.b32.xlu0 %v585, 64
        %v592 = vpop.permute.xlu0 %591
        %v594 = vadd.f32 %v590, %v592
        %595 = vrot.lane.b32.xlu0 %v585, 32
        %v596 = vpop.permute.xlu0 %595
        %v598 = vadd.f32 %v594, %v596
        %v599 = vmax.f32 %v598, 0.0
        %v600 = vld [vmem:[%s6] sm:$0xff]
        %v601 = vld [vmem:[%s6 + $0x8] sm:$0xff]
        %v602 = vld [vmem:[%s6 + $0x10] sm:$0xff]
        %v603 = vld [vmem:[%s6 + $0x18] sm:$0xff]
        %v604 = vld [vmem:[%s7] sm:$0x1]
        %v606 = vlaneseq
        %v607 = vshrl.u32 %v606, 7
        %v608 = vsub.s32 0, %v607
        %v609 = vrot.slane %v604, %v608
        %v612 = vsel %vm426, %v599, 0
        %614 = vmatprep.subr.mxu0 0.0
        %615 = vmatpush1.msra.mxu0 %v600
        %616 = vmatprep.subr.mxu0 0.0
        %617 = vmatpush1.msra.mxu0 %v601
        %618 = vmatprep.subr.mxu0 0.0
        %619 = vmatpush1.msra.mxu0 %v602
        %620 = vmatprep.subr.mxu0 0.0
        %621 = vmatpush1.msra.mxu0 %v603
        %622 = vmatprep.subr.mxu0 0.0
        %623 = vmatpush1.msra.mxu0 0.0
        %624 = vmatprep.subr.mxu0 0.0
        %625 = vmatpush1.msra.mxu0 0.0
        %626 = vmatprep.subr.mxu0 0.0
        %627 = vmatpush1.msra.mxu0 0.0
        %628 = vmatprep.subr.mxu0 0.0
        %629 = vmatpush1.msra.mxu0 0.0
        %630 = vmatprep.subr.mxu0 0.0
        %631 = vmatpush1.msra.mxu0 0.0
        %632 = vmatprep.subr.mxu0 0.0
        %633 = vmatpush1.msra.mxu0 0.0
        %634 = vmatprep.subr.mxu0 0.0
        %635 = vmatpush1.msra.mxu0 0.0
        %636 = vmatprep.subr.mxu0 0.0
        %637 = vmatpush1.msra.mxu0 0.0
        %638 = vmatprep.subr.mxu0 0.0
        %639 = vmatpush1.msra.mxu0 0.0
        %640 = vmatprep.subr.mxu0 0.0
        %641 = vmatpush1.msra.mxu0 0.0
        %642 = vmatprep.subr.mxu0 0.0
        %643 = vmatpush1.msra.mxu0 0.0
        %644 = vmatprep.subr.mxu0 0.0
        %645 = vmatpush1.msra.mxu0 0.0
        %646 = vmatprep.subr.mxu0 0.0
        %647 = vmatpush1.msra.mxu0 0.0
        %648 = vmatprep.subr.mxu0 0.0
        %649 = vmatpush1.msra.mxu0 0.0
        %650 = vmatprep.subr.mxu0 0.0
        %651 = vmatpush1.msra.mxu0 0.0
        %652 = vmatprep.subr.mxu0 0.0
        %653 = vmatpush1.msra.mxu0 0.0
        %654 = vmatprep.subr.mxu0 0.0
        %655 = vmatpush1.msra.mxu0 0.0
        %656 = vmatprep.subr.mxu0 0.0
        %657 = vmatpush1.msra.mxu0 0.0
        %658 = vmatprep.subr.mxu0 0.0
        %659 = vmatpush1.msra.mxu0 0.0
        %660 = vmatprep.subr.mxu0 0.0
        %661 = vmatpush1.msra.mxu0 0.0
        %662 = vmatprep.subr.mxu0 0.0
        %663 = vmatpush1.msra.mxu0 0.0
        %664 = vmatprep.subr.mxu0 0.0
        %665 = vmatpush1.msra.mxu0 0.0
        %666 = vmatprep.subr.mxu0 0.0
        %667 = vmatpush1.msra.mxu0 0.0
        %668 = vmatprep.subr.mxu0 0.0
        %669 = vmatpush1.msra.mxu0 0.0
        %670 = vmatprep.subr.mxu0 0.0
        %671 = vmatpush1.msra.mxu0 0.0
        %672 = vmatprep.subr.mxu0 0.0
        %673 = vmatpush1.msra.mxu0 0.0
        %674 = vmatprep.subr.mxu0 0.0
        %675 = vmatpush1.msra.mxu0 0.0
        %676 = vmatprep.subr.mxu0 0.0
        %677 = vmatpush1.msra.mxu0 0.0
        %678 = vmatprep.mubr.f32.mxu0 0.0
        %679 = vmatmul.mubr.f32.gmra.mrb[0].mxu0 %v612
        %v680 = vpop.f32.mrb[0].mxu0
        %v681 = vadd.f32 %v609, %v680
        %v682 = vpop.f32.mrb[0].mxu0
        %683 = vdwg.mxu0
        %v684 = vmax.f32 %v681, 0.0
        %v685 = vld [vmem:[%s8] sm:$0x1]
        %v687 = vlaneseq
        %v688 = vshrl.u32 %v687, 7
        %v689 = vsub.s32 0, %v688
        %v690 = vrot.slane %v685, %v689
        %v692 = vmul.f32 %v684, %v690
        %vm693 = vcmask 130048
        %v694 = vsel %vm693, %v692, 0.0
        %695 = vadd.xlane.f32.xlu0 %v694
        %v696 = vpop.xlane.xlu0 %695
        %v697 = vld [vmem:[#allocation2] sm:$0x1]
        %v699 = vlaneseq
        %v700 = vshrl.u32 %v699, 7
        %v701 = vsub.s32 0, %v700
        %v702 = vrot.slane %v697, %v701
        %v704 = vadd.f32 %v696, %v702
        %v705 = vmul.f32 %v704, 2.0
        %v706 = vxor.u32 %v705, 2147483648
        %v707 = vmul.f32 %v706, 1.442695
        %v708 = vpow.pop %v707
        %v709 = vadd.f32 %v708, 1.0
        %v710 = vrcp.pop %v709
        %v711 = vmul.f32 1.0, %v710
        %v712 = vmul.f32 %v711, 0.33333334
        %vm713 = vcmask 7168
        %714 = vst.msk [vmem:[%s413] sm:$0xff] %vm713, %v712
        %p715 = scmp.lt.s32.totalorder %s29, 1
        %s716 = scalar_select %p715, %s29, 1
        %s717 = smul.addr %s716, 8
        %s718 = scalar_lea.vmem %s10, %s717
        // Predicated region
        $region69: #{tpu_custom_call.1} parent=59 // pred_check
          %p719 = pneg %p267
        $region70: #{tpu_custom_call.1} parent=59 // pred_check_branch
          %721 = sbr.rel (%p719) target = $region72
        $region71: #{tpu_custom_call.1} parent=59 // pred_region
          _
        $region72: #{tpu_custom_call.1} parent=59 // pred_fallthru
          _
      $region60: #{tpu_custom_call.1} parent=5 // pred_fallthru
        _
      %p722 = scmp.le.s32.totalorder 2, %s24
      // Predicated region
      $region73: #{tpu_custom_call.1} parent=5 // pred_check
        %p723 = pneg %p722
      $region74: #{tpu_custom_call.1} parent=5 // pred_check_branch
        %725 = sbr.rel (%p723) target = $region76
      $region75: #{tpu_custom_call.1} parent=5 // pred_region
        %s726 = ssub.s32 %s24, 2
        // Predicated region
        $region77: #{tpu_custom_call.1} parent=75 // pred_check
          %p727 = pneg %p273
        $region78: #{tpu_custom_call.1} parent=75 // pred_check_branch
          %729 = sbr.rel (%p727) target = $region80
        $region79: #{tpu_custom_call.1} parent=75 // pred_region
          %p730 = scmp.lt.s32.totalorder %s30, 1
          %s731 = scalar_select %p730, %s30, 1
          %s732 = smul.addr %s731, 8
          %s733 = scalar_lea.vmem %s10, %s732
        $region80: #{tpu_custom_call.1} parent=75 // pred_fallthru
          _
      $region76: #{tpu_custom_call.1} parent=5 // pred_fallthru
        _
    $region6: #{tpu_custom_call.1} parent=1 // loop_footer
      %s28 = sadd.s32 1, %s24
    $region7: #{tpu_custom_call.1} parent=1 // loop_footer_branch
      %23 = sbr.rel target = $region3
    $region8: #{tpu_custom_call.1} parent=1 // loop_exit
      _
    %734 = vsyncpa [#allocation4], 1
    %s735 = scalar_lea.sflag [#allocation4], 1
    %736 = vsyncpa %s735, 1
    %737 = vsyncpa [#allocation6], 1
    %s738 = scalar_lea.sflag [#allocation6], 1
    %739 = vsyncpa %s738, 1

</llo_original>
